<compile_context>
chip_gen: v7x
topology: tpu7x:2x2x1
jax: 0.10.0
libtpu: 0.0.40
codegen_flags: <defaults>
</compile_context>

<pallas_src>
import jax
import jax.numpy as jnp
from jax.experimental import pallas as pl
from jax.experimental.pallas import tpu as pltpu

_LANE = 128
_MIN_GRID_STEPS = 4   # 2 TensorCores (v7x) x 2 for even balance + pipelining


def _swish_kernel(x_ref, o_ref):
    x = x_ref[...]
    # sigmoid(x) = 0.5 * (tanh(0.5*x) + 1): tanh goes to the EUP slot, the
    # remaining mul/adds to the VPU — no divide; math stays in x's dtype.
    half = jnp.asarray(0.5, x.dtype)
    one = jnp.asarray(1.0, x.dtype)
    o_ref[...] = x * (half * (jnp.tanh(x * half) + one))


def _sublane_multiple(dtype) -> int:
    # Full-vreg packing: 8 sublanes of f32, 16 of bf16/f16.
    return {4: 8, 2: 16}.get(jnp.dtype(dtype).itemsize, 8)


def _pick_block_bytes() -> int:
    try:
        kind = jax.devices()[0].device_kind.lower()
    except Exception:
        kind = ""
    # v6e / v7x: 32 MiB scoped VMEM -> 4 MiB blocks (x4 buffers = 16 MiB).
    # v5e / unknown: 16 MiB scoped VMEM -> 2 MiB blocks (x4 buffers = 8 MiB).
    if ("v6" in kind) or ("v7" in kind) or ("7x" in kind):
        return 4 * 1024 * 1024
    return 2 * 1024 * 1024


def _swish_flat_aligned(x_flat: jnp.ndarray) -> jnp.ndarray:
    """Swish on a flat float array whose length is a multiple of 128."""
    m = x_flat.size
    dtype = x_flat.dtype
    itemsize = jnp.dtype(dtype).itemsize
    sub = _sublane_multiple(dtype)

    # Widest lane-dense slab that divides exactly (no pad, wide unmasked vst).
    lanes = _LANE
    for cand in (512, 256):
        if m % cand == 0:
            lanes = cand
            break
    rows = m // lanes
    x2d = x_flat.reshape(rows, lanes)

    # Rows per block: hit the byte budget, stay a multiple of the sublane
    # count, and cap so the grid has >= _MIN_GRID_STEPS steps whenever the
    # tensor is big enough (keeps both v7x TensorCores busy + pipelined).
    tr = max(sub, (_pick_block_bytes() // (lanes * itemsize)) // sub * sub)
    if rows > 2 * sub:
        split_cap = max(sub, (pl.cdiv(rows, _MIN_GRID_STEPS) // sub) * sub)
        tr = min(tr, split_cap)
    tr = min(tr, rows)  # tr < rows is a multiple of sub; tr == rows uses the full-dim rule

    grid = (pl.cdiv(rows, tr),)

    out2d = pl.pallas_call(
        _swish_kernel,
        out_shape=jax.ShapeDtypeStruct((rows, lanes), dtype),
        grid_spec=pltpu.PrefetchScalarGridSpec(
            num_scalar_prefetch=0,
            grid=grid,
            in_specs=[pl.BlockSpec((tr, lanes), lambda i: (i, 0))],
            out_specs=pl.BlockSpec((tr, lanes), lambda i: (i, 0)),
        ),
        compiler_params=pltpu.CompilerParams(
            dimension_semantics=("parallel",),
        ),
        cost_estimate=pl.CostEstimate(
            flops=4 * m,
            transcendentals=m,
            bytes_accessed=2 * m * itemsize,
        ),
    )(x2d)
    return out2d.reshape(-1)


def swish(x: jnp.ndarray) -> jnp.ndarray:
    """Elementwise Swish (x * sigmoid(x)) via Pallas; any shape, float dtype."""
    orig_shape = x.shape
    n = x.size
    if n == 0:
        return x
    if not jnp.issubdtype(x.dtype, jnp.floating):
        # TODO(synk): integer/fp8 inputs need an explicit cast path; fall back.
        xf = x.astype(jnp.float32)
        return (jax.nn.sigmoid(xf) * xf).astype(x.dtype)

    x_flat = x.reshape(-1)
    rem = n % _LANE
    if rem == 0:
        return _swish_flat_aligned(x_flat).reshape(orig_shape)

    # Misaligned size: kernel on the aligned bulk, <128-element tail in plain
    # JAX, then concatenate (cheaper than a full-tensor pad + slice).
    bulk = n - rem
    if bulk == 0:
        return jax.nn.sigmoid(x) * x
    head = _swish_flat_aligned(x_flat[:bulk])
    tail = x_flat[bulk:]
    tail = jax.nn.sigmoid(tail) * tail
    return jnp.concatenate([head, tail]).reshape(orig_shape)


if __name__ == "__main__":
    key = jax.random.PRNGKey(0)
    x = jax.random.normal(key, (2, 4, 16, 16), dtype=jnp.float32)  # NCHW activations

    y = jax.block_until_ready(swish(x))
    y_ref = jax.nn.sigmoid(x) * x
    assert y.shape == x.shape and y.dtype == x.dtype
    assert jnp.allclose(y, y_ref, atol=1e-5, rtol=1e-5)

    # Ragged size (not a multiple of 128) exercises the bulk + tail path.
    x2 = jax.random.normal(jax.random.PRNGKey(1), (3, 5, 7, 11), dtype=jnp.float32)
    y2 = jax.block_until_ready(swish(x2))
    assert jnp.allclose(y2, jax.nn.sigmoid(x2) * x2, atol=1e-5, rtol=1e-5)

    # bf16 path (math + HBM traffic stay in bf16).
    x3 = jax.random.normal(jax.random.PRNGKey(2), (2, 4, 16, 16), dtype=jnp.bfloat16)
    y3 = jax.block_until_ready(swish(x3))
    y3_ref = jax.nn.sigmoid(x3) * x3
    assert y3.shape == x3.shape and y3.dtype == jnp.bfloat16
    assert jnp.allclose(y3.astype(jnp.float32), y3_ref.astype(jnp.float32),
                        atol=2e-2, rtol=2e-2)

    print("KERNEL_OK")
</pallas_src>

<mosaic_0001>
module attributes {stable_mosaic.version = 11 : i64} {
  func.func @_swish_kernel(%arg0: i32, %arg1: memref<4x512xf32, #tpu.memory_space<vmem>>, %arg2: memref<4x512xf32, #tpu.memory_space<vmem>>) attributes {dimension_semantics = [#tpu.dimension_semantics<parallel>], iteration_bounds = array<i64: 1>, scalar_prefetch = 0 : i64, scratch_operands = 0 : i64, tpu.core_type = #tpu.core_type<tc>, window_params = [{transform_indices = @transform_0, window_bounds = array<i64: 4, 512>}, {transform_indices = @transform_1, window_bounds = array<i64: 4, 512>}]} {
    %c0 = arith.constant 0 : index
    %c0_0 = arith.constant 0 : index
    %0 = vector.load %arg1[%c0, %c0_0] : memref<4x512xf32, #tpu.memory_space<vmem>>, vector<4x512xf32>
    %cst = arith.constant 5.000000e-01 : f32
    %1 = vector.broadcast %cst : f32 to vector<4x512xf32>
    %2 = arith.mulf %0, %1 : vector<4x512xf32>
    %3 = math.tanh %2 : vector<4x512xf32>
    %cst_1 = arith.constant 1.000000e+00 : f32
    %4 = vector.broadcast %cst_1 : f32 to vector<4x512xf32>
    %5 = arith.addf %3, %4 : vector<4x512xf32>
    %cst_2 = arith.constant 5.000000e-01 : f32
    %6 = vector.broadcast %cst_2 : f32 to vector<4x512xf32>
    %7 = arith.mulf %6, %5 : vector<4x512xf32>
    %8 = arith.mulf %0, %7 : vector<4x512xf32>
    %c0_3 = arith.constant 0 : index
    %c0_4 = arith.constant 0 : index
    %9 = vector.load %arg2[%c0_3, %c0_4] : memref<4x512xf32, #tpu.memory_space<vmem>>, vector<4x512xf32>
    tpu.vector_store %arg2[%c0_3, %c0_4], %8 {strides = array<i32>} : memref<4x512xf32, #tpu.memory_space<vmem>>, vector<4x512xf32>,
    return
  }
  func.func @transform_0(%arg0: i32) -> (i32, i32) {
    %c0_i32 = arith.constant 0 : i32
    %c0_i32_0 = arith.constant 0 : i32
    return %arg0, %c0_i32 : i32, i32
  }
  func.func @transform_1(%arg0: i32) -> (i32, i32) {
    %c0_i32 = arith.constant 0 : i32
    %c0_i32_0 = arith.constant 0 : i32
    return %arg0, %c0_i32 : i32, i32
  }
}

</mosaic_0001>

<llo_original>
// kernel: tpu_custom_call.1
$region0: #{tpu_custom_call.1}
  #allocation0 [shape = 'u32[]', space=smem, size = 0x4, offset = 0x4, fixed_abs, tag = 'smem constant byte address 0x4 - core index']
  #allocation1 [shape = 'u32[144,128]{1,0:T(1,128)}', space=vmem, size = 0x12000, scoped, tag = 'internal scratch']
  %s0 = inlined_call_operand.hbm [shape: f32[4,512], index: 0, kind: input, shape index: {}]
  %s1 = inlined_call_operand.hbm [shape: f32[4,512], index: 1, kind: output, shape index: {}]
  %s2 = sld [smem:[#allocation0]]
  $region18: #{tpu_custom_call.1} parent=0
    _
  %s4 = ssub.s32 1, %s2
  %s5 = scalar_select 0, %s4, %s2
  $region1: #{tpu_custom_call.1} parent=0
    #allocation2 [shape = 'u8[8192]{0}', space=vmem, size = 0x2000, scoped, tag = 'input window, operand 0, single buffered']
    #allocation3 [shape = 's32[1]{0}', space=sflag, size = 0x4, scoped, tag = 'scoped memory for tpu_custom_call.1']
    #allocation4 [shape = 's32[1]{0}', space=sflag, size = 0x4, scoped, tag = 'scoped memory for tpu_custom_call.1']
    #allocation5 [shape = 'u8[8192]{0}', space=vmem, size = 0x2000, scoped, tag = 'output window, operand 0, single buffered']
    %6 = vsyncpa [#allocation3], 0
    %7 = vsyncpa [#allocation4], 0
    // Predicated region
    $region2: #{tpu_custom_call.1} parent=1 // pred_check
      _
    $region3: #{tpu_custom_call.1} parent=1 // pred_check_branch
      %9 = sbr.rel (0) target = $region5
    $region4: #{tpu_custom_call.1} parent=1 // pred_region
      %s11 = ssub.s32 256, 256
      %12 = vsyncadd [#allocation3], %s11
      %s14 = sshll.u32 [#allocation2], 4
      %s15 = int_to_ptr.vmem [resolvable:$true] %s14
      %17 = dma.hbm_to_vmem [thread:$0]  %s0, 256, %s15, [#allocation3]
    $region5: #{tpu_custom_call.1} parent=1 // pred_fallthru
      _
    // Predicated region
    $region6: #{tpu_custom_call.1} parent=1 // pred_check
      _
    $region7: #{tpu_custom_call.1} parent=1 // pred_check_branch
      %19 = sbr.rel (0) target = $region9
    $region8: #{tpu_custom_call.1} parent=1 // pred_region
      %20 = dma.done [#allocation3], 256
    $region9: #{tpu_custom_call.1} parent=1 // pred_fallthru
      _
    %v21 = vld [vmem:[#allocation2] sm:$0xff]
    %v22 = vld [vmem:[#allocation2 + $0x8] sm:$0xff]
    %v23 = vmul.f32 %v21, 0.5
    %v24 = vmul.f32 %v22, 0.5
    %v25 = vtanh.pop %v23
    %v26 = vtanh.pop %v24
    %v27 = vadd.f32 %v25, 1.0
    %v28 = vadd.f32 %v26, 1.0
    %v29 = vmul.f32 %v27, 0.5
    %v30 = vmul.f32 %v28, 0.5
    %v31 = vmul.f32 %v21, %v29
    %v32 = vmul.f32 %v22, %v30
    %33 = vst [vmem:[#allocation5] sm:$0xff] %v31
    %34 = vst [vmem:[#allocation5 + $0x8] sm:$0xff] %v32
    // Predicated region
    $region10: #{tpu_custom_call.1} parent=1 // pred_check
      _
    $region11: #{tpu_custom_call.1} parent=1 // pred_check_branch
      %36 = sbr.rel (0) target = $region13
    $region12: #{tpu_custom_call.1} parent=1 // pred_region
      %s38 = ssub.s32 256, 256
      %39 = vsyncadd [#allocation4], %s38
      %s41 = sshll.u32 [#allocation5], 4
      %s42 = int_to_ptr.vmem [resolvable:$true] %s41
      %44 = dma.vmem_to_hbm [thread:$0]  %s42, 256, %s1, [#allocation4]
    $region13: #{tpu_custom_call.1} parent=1 // pred_fallthru
      _
    // Predicated region
    $region14: #{tpu_custom_call.1} parent=1 // pred_check
      _
    $region15: #{tpu_custom_call.1} parent=1 // pred_check_branch
      %46 = sbr.rel (0) target = $region17
    $region16: #{tpu_custom_call.1} parent=1 // pred_region
      %47 = dma.done [#allocation4], 256
    $region17: #{tpu_custom_call.1} parent=1 // pred_fallthru
      _
    %48 = vsyncpa [#allocation3], 1
    %49 = vsyncpa [#allocation4], 1

</llo_original>
